<compile_context>
chip_gen: v5e
topology: v5e:2x2
jax: 0.10.0
libtpu: 0.0.40
codegen_flags: <defaults>
</compile_context>

<pallas_src>
import functools

import jax
import jax.numpy as jnp
from jax.experimental import pallas as pl
from jax.experimental.pallas import tpu as pltpu


def _images_per_step(n, h, w, max_rows=1024):
    """Largest divisor Nb of n with Nb*h*w <= max_rows (fills the MXU M dim)."""
    nb = 1
    for cand in range(1, n + 1):
        if n % cand == 0 and cand * h * w <= max_rows:
            nb = cand
    return nb


def _bottleneck_kernel(x_ref, w1_ref, w2_ref, w3_ref, o_ref, pad_ref, *,
                       nb, h, w, cmid):
    # x_ref : (Nb*H*W, Cin)        bf16, rows ordered (n, y, x)
    # w1_ref: (Cin, Cmid)          bf16   1x1 conv
    # w2_ref: (3, 3, Cmid, Cmid)   bf16   3x3 conv (HWIO)
    # w3_ref: (Cmid, Cout)         bf16   1x1 conv
    # o_ref : (Nb*H*W, Cout)       f32
    # pad_ref: VMEM (Nb, H, W+2, Cmid) f32 -- conv2 input padded along W only.
    rows = nb * h * w

    # ---- conv1: 1x1 conv == channel matmul (bf16 in, f32 accumulate), ReLU ----
    h1 = jnp.dot(x_ref[...], w1_ref[...], preferred_element_type=jnp.float32)
    h1 = jnp.maximum(h1, 0.0)                               # (rows, Cmid) f32

    # ---- conv2: 3x3, stride 1, padding 1 ----
    # dy (kh) shifts stay in registers (leading-axis slices/concat); only the dx (kw)
    # shifts use the scratch, which is padded along W only: 1 write + 3 reads of h1.
    zero_col = jnp.zeros((nb, h, 1, cmid), jnp.float32)
    pad_ref[:, :, 0:1, :] = zero_col                        # left border (x = -1)
    pad_ref[:, :, w + 1:w + 2, :] = zero_col                # right border (x = W)
    pad_ref[:, :, 1:w + 1, :] = h1.reshape(nb, h, w, cmid)

    def shift_h(a, sy):
        # out[:, y] = a[:, y + sy], zero outside [0, H).  Axis 1 is a leading
        # (non-tiled) dim, so this is pure register bookkeeping (no VMEM traffic).
        if sy == 0:
            return a
        zero_row = jnp.zeros((nb, 1) + a.shape[2:], a.dtype)
        if sy > 0:
            return jnp.concatenate([a[:, sy:], zero_row], axis=1)
        return jnp.concatenate([zero_row, a[:, :sy]], axis=1)

    acc = jnp.zeros((rows, cmid), jnp.float32)
    for dx in range(3):
        # slab[n, y, x, c] == h1[n, y, x + dx - 1, c]  (zero outside the image)
        slab = pad_ref[:, :, dx:dx + w, :]
        for dy in range(3):
            tap = shift_h(slab, dy - 1)                     # h1[n, y+dy-1, x+dx-1, c]
            acc += jnp.dot(tap.reshape(rows, cmid).astype(jnp.bfloat16),
                           w2_ref[dy, dx],
                           preferred_element_type=jnp.float32)
    h2 = jnp.maximum(acc, 0.0).astype(jnp.bfloat16)         # (rows, Cmid)

    # ---- conv3: 1x1 conv, residual add (re-read x late => short live range), ReLU ----
    h3 = jnp.dot(h2, w3_ref[...], preferred_element_type=jnp.float32)
    out = h3 + x_ref[...].astype(jnp.float32)               # identity shortcut
    o_ref[...] = jnp.maximum(out, 0.0).astype(o_ref.dtype)


def bottleneck_forward(x_nhwc, w1, w2, w3):
    """Bottleneck forward.

    x_nhwc: (N, H, W, Cin) f32;  w1: (Cin, Cmid);  w2: (3, 3, Cmid, Cmid) HWIO;
    w3: (Cmid, Cout) with Cout == Cin (identity residual). Returns (N, H, W, Cout) f32.
    """
    n, h, w, cin = x_nhwc.shape
    cmid = w1.shape[1]
    cout = w3.shape[1]
    assert cout == cin, "identity residual requires inplanes == planes*expansion"
    assert w2.shape == (3, 3, cmid, cmid)

    nb = _images_per_step(n, h, w)
    rows = nb * h * w

    # bf16 operands on the HBM side (half the DMA bytes); f32 accumulation in-kernel.
    x2d = x_nhwc.astype(jnp.bfloat16).reshape(n * h * w, cin)
    w1b = w1.astype(jnp.bfloat16)
    w2b = w2.astype(jnp.bfloat16)
    w3b = w3.astype(jnp.bfloat16)

    kernel = functools.partial(_bottleneck_kernel, nb=nb, h=h, w=w, cmid=cmid)

    flops = 2 * n * h * w * (cin * cmid + 9 * cmid * cmid + cmid * cout)
    bytes_accessed = (n * h * w * cin * 2
                      + (cin * cmid + 9 * cmid * cmid + cmid * cout) * 2
                      + n * h * w * cout * 4)

    out2d = pl.pallas_call(
        kernel,
        out_shape=jax.ShapeDtypeStruct((n * h * w, cout), jnp.float32),
        grid=(n // nb,),
        in_specs=[
            pl.BlockSpec((rows, cin), lambda i: (i, 0)),
            pl.BlockSpec((cin, cmid), lambda i: (0, 0)),
            pl.BlockSpec((3, 3, cmid, cmid), lambda i: (0, 0, 0, 0)),
            pl.BlockSpec((cmid, cout), lambda i: (0, 0)),
        ],
        out_specs=pl.BlockSpec((rows, cout), lambda i: (i, 0)),
        scratch_shapes=[pltpu.VMEM((nb, h, w + 2, cmid), jnp.float32)],
        compiler_params=pltpu.CompilerParams(
            dimension_semantics=("parallel",)),
        cost_estimate=pl.CostEstimate(
            flops=flops, transcendentals=0, bytes_accessed=bytes_accessed),
    )(x2d, w1b, w2b, w3b)
    return out2d.reshape(n, h, w, cout)


def reference_bottleneck(x_nhwc, w1, w2, w3):
    """Pure-JAX f32 reference (NHWC convs) mirroring the PyTorch forward."""
    dn = ('NHWC', 'HWIO', 'NHWC')
    a = jax.lax.conv_general_dilated(x_nhwc, w1.reshape(1, 1, *w1.shape),
                                     (1, 1), 'VALID', dimension_numbers=dn)
    a = jnp.maximum(a, 0.0)
    a = jax.lax.conv_general_dilated(a, w2, (1, 1), ((1, 1), (1, 1)),
                                     dimension_numbers=dn)
    a = jnp.maximum(a, 0.0)
    a = jax.lax.conv_general_dilated(a, w3.reshape(1, 1, *w3.shape),
                                     (1, 1), 'VALID', dimension_numbers=dn)
    return jnp.maximum(a + x_nhwc, 0.0)


if __name__ == "__main__":
    key = jax.random.PRNGKey(0)
    k1, k2, k3, kx = jax.random.split(key, 4)

    N, H, W = 2, 8, 8
    inplanes, planes, expansion = 16, 4, 4
    Cin, Cmid, Cout = inplanes, planes, planes * expansion      # 16, 4, 16

    # PyTorch parameter shapes (OIHW), initialized deterministically in-script.
    w1_torch = jax.random.normal(k1, (Cmid, Cin, 1, 1), jnp.float32) * 0.1   # conv1.weight
    w2_torch = jax.random.normal(k2, (Cmid, Cmid, 3, 3), jnp.float32) * 0.1  # conv2.weight
    w3_torch = jax.random.normal(k3, (Cout, Cmid, 1, 1), jnp.float32) * 0.1  # conv3.weight
    x_nchw = jax.random.normal(kx, (N, Cin, H, W), jnp.float32)              # PyTorch input

    # Convert to the kernel's layout (NHWC activations, HWIO / matmul-shaped weights).
    x_nhwc = jnp.transpose(x_nchw, (0, 2, 3, 1))                 # (N, H, W, Cin)
    w1 = jnp.transpose(w1_torch[:, :, 0, 0], (1, 0))             # (Cin, Cmid)
    w2 = jnp.transpose(w2_torch, (2, 3, 1, 0))                   # (3, 3, Cmid, Cmid) HWIO
    w3 = jnp.transpose(w3_torch[:, :, 0, 0], (1, 0))             # (Cmid, Cout)

    out = jax.block_until_ready(bottleneck_forward(x_nhwc, w1, w2, w3))

    # Reference on the same bf16-rounded operands the kernel consumes, computed in f32.
    bf = lambda a: a.astype(jnp.bfloat16).astype(jnp.float32)
    ref = reference_bottleneck(bf(x_nhwc), bf(w1), bf(w2), bf(w3))
    max_err = float(jnp.max(jnp.abs(out - ref)))
    assert jnp.allclose(out, ref, atol=1e-2, rtol=1e-2), f"max abs err {max_err}"

    print("KERNEL_OK")
</pallas_src>

<mosaic_0001>
module attributes {stable_mosaic.version = 11 : i64} {
  func.func @_bottleneck_kernel(%arg0: i32, %arg1: memref<128x16xbf16, #tpu.memory_space<vmem>>, %arg2: memref<16x4xbf16, #tpu.memory_space<vmem>>, %arg3: memref<3x3x4x4xbf16, #tpu.memory_space<vmem>>, %arg4: memref<4x16xbf16, #tpu.memory_space<vmem>>, %arg5: memref<128x16xf32, #tpu.memory_space<vmem>>, %arg6: memref<2x8x10x4xf32, #tpu.memory_space<vmem>>) attributes {dimension_semantics = [#tpu.dimension_semantics<parallel>], iteration_bounds = array<i64: 1>, scalar_prefetch = 0 : i64, scratch_operands = 1 : i64, tpu.core_type = #tpu.core_type<tc>, window_params = [{transform_indices = @transform_0, window_bounds = array<i64: 128, 16>}, {pipeline_mode = #tpu.pipeline_mode<synchronous>, transform_indices = @transform_1, window_bounds = array<i64: 16, 4>}, {pipeline_mode = #tpu.pipeline_mode<synchronous>, transform_indices = @transform_2, window_bounds = array<i64: 3, 3, 4, 4>}, {pipeline_mode = #tpu.pipeline_mode<synchronous>, transform_indices = @transform_3, window_bounds = array<i64: 4, 16>}, {transform_indices = @transform_4, window_bounds = array<i64: 128, 16>}]} {
    %c0 = arith.constant 0 : index
    %c0_0 = arith.constant 0 : index
    %0 = vector.load %arg1[%c0, %c0_0] : memref<128x16xbf16, #tpu.memory_space<vmem>>, vector<128x16xbf16>
    %c0_1 = arith.constant 0 : index
    %c0_2 = arith.constant 0 : index
    %1 = vector.load %arg2[%c0_1, %c0_2] : memref<16x4xbf16, #tpu.memory_space<vmem>>, vector<16x4xbf16>
    %cst = arith.constant dense<0.000000e+00> : vector<128x4xf32>
    %2 = tpu.matmul %0, %1, %cst {dimension_numbers = #tpu.dot_dimension_numbers<[1], [0], [0], [1], [0, 0, 1, 1], [], []>} : vector<128x16xbf16>, vector<16x4xbf16>, vector<128x4xf32> -> vector<128x4xf32>
    %cst_3 = arith.constant 0.000000e+00 : f32
    %3 = vector.broadcast %cst_3 : f32 to vector<128x4xf32>
    %4 = arith.maximumf %2, %3 : vector<128x4xf32>
    %cst_4 = arith.constant 0.000000e+00 : f32
    %5 = vector.broadcast %cst_4 : f32 to vector<2x8x1x4xf32>
    %c0_5 = arith.constant 0 : index
    %c0_6 = arith.constant 0 : index
    %c0_7 = arith.constant 0 : index
    %c0_8 = arith.constant 0 : index
    %6 = vector.load %arg6[%c0_5, %c0_6, %c0_7, %c0_8] : memref<2x8x10x4xf32, #tpu.memory_space<vmem>>, vector<2x8x1x4xf32>
    tpu.vector_store %arg6[%c0_5, %c0_6, %c0_7, %c0_8], %5 {strides = array<i32>} : memref<2x8x10x4xf32, #tpu.memory_space<vmem>>, vector<2x8x1x4xf32>,
    %c0_9 = arith.constant 0 : index
    %c0_10 = arith.constant 0 : index
    %c9 = arith.constant 9 : index
    %c0_11 = arith.constant 0 : index
    %7 = vector.load %arg6[%c0_9, %c0_10, %c9, %c0_11] : memref<2x8x10x4xf32, #tpu.memory_space<vmem>>, vector<2x8x1x4xf32>
    tpu.vector_store %arg6[%c0_9, %c0_10, %c9, %c0_11], %5 {strides = array<i32>} : memref<2x8x10x4xf32, #tpu.memory_space<vmem>>, vector<2x8x1x4xf32>,
    %8 = vector.shape_cast %4 : vector<128x4xf32> to vector<2x8x8x4xf32>
    %c0_12 = arith.constant 0 : index
    %c0_13 = arith.constant 0 : index
    %c1 = arith.constant 1 : index
    %c0_14 = arith.constant 0 : index
    %9 = vector.load %arg6[%c0_12, %c0_13, %c1, %c0_14] : memref<2x8x10x4xf32, #tpu.memory_space<vmem>>, vector<2x8x8x4xf32>
    tpu.vector_store %arg6[%c0_12, %c0_13, %c1, %c0_14], %8 {strides = array<i32>} : memref<2x8x10x4xf32, #tpu.memory_space<vmem>>, vector<2x8x8x4xf32>,
    %cst_15 = arith.constant 0.000000e+00 : f32
    %10 = vector.broadcast %cst_15 : f32 to vector<128x4xf32>
    %c0_16 = arith.constant 0 : index
    %c0_17 = arith.constant 0 : index
    %c0_18 = arith.constant 0 : index
    %c0_19 = arith.constant 0 : index
    %11 = vector.load %arg6[%c0_16, %c0_17, %c0_18, %c0_19] : memref<2x8x10x4xf32, #tpu.memory_space<vmem>>, vector<2x8x8x4xf32>
    %cst_20 = arith.constant 0.000000e+00 : f32
    %12 = vector.broadcast %cst_20 : f32 to vector<2x1x8x4xf32>
    %13 = vector.extract_strided_slice %11 {offsets = [0, 0, 0, 0], sizes = [2, 7, 8, 4], strides = [1, 1, 1, 1]} : vector<2x8x8x4xf32> to vector<2x7x8x4xf32>
    %14 = tpu.concatenate %12, %13 in 1 : vector<2x1x8x4xf32>, vector<2x7x8x4xf32> -> vector<2x8x8x4xf32>
    %15 = vector.shape_cast %14 : vector<2x8x8x4xf32> to vector<128x4xf32>
    %16 = arith.truncf %15 : vector<128x4xf32> to vector<128x4xbf16>
    %c0_21 = arith.constant 0 : index
    %c0_22 = arith.constant 0 : index
    %c0_23 = arith.constant 0 : index
    %c0_24 = arith.constant 0 : index
    %17 = vector.load %arg3[%c0_21, %c0_22, %c0_23, %c0_24] : memref<3x3x4x4xbf16, #tpu.memory_space<vmem>>, vector<1x1x4x4xbf16>
    %18 = vector.shape_cast %17 : vector<1x1x4x4xbf16> to vector<4x4xbf16>
    %cst_25 = arith.constant dense<0.000000e+00> : vector<128x4xf32>
    %19 = tpu.matmul %16, %18, %cst_25 {dimension_numbers = #tpu.dot_dimension_numbers<[1], [0], [0], [1], [0, 0, 1, 1], [], []>} : vector<128x4xbf16>, vector<4x4xbf16>, vector<128x4xf32> -> vector<128x4xf32>
    %20 = arith.addf %10, %19 : vector<128x4xf32>
    %21 = vector.shape_cast %11 : vector<2x8x8x4xf32> to vector<128x4xf32>
    %22 = arith.truncf %21 : vector<128x4xf32> to vector<128x4xbf16>
    %c1_26 = arith.constant 1 : index
    %c0_27 = arith.constant 0 : index
    %c0_28 = arith.constant 0 : index
    %c0_29 = arith.constant 0 : index
    %23 = vector.load %arg3[%c1_26, %c0_27, %c0_28, %c0_29] : memref<3x3x4x4xbf16, #tpu.memory_space<vmem>>, vector<1x1x4x4xbf16>
    %24 = vector.shape_cast %23 : vector<1x1x4x4xbf16> to vector<4x4xbf16>
    %cst_30 = arith.constant dense<0.000000e+00> : vector<128x4xf32>
    %25 = tpu.matmul %22, %24, %cst_30 {dimension_numbers = #tpu.dot_dimension_numbers<[1], [0], [0], [1], [0, 0, 1, 1], [], []>} : vector<128x4xbf16>, vector<4x4xbf16>, vector<128x4xf32> -> vector<128x4xf32>
    %26 = arith.addf %20, %25 : vector<128x4xf32>
    %cst_31 = arith.constant 0.000000e+00 : f32
    %27 = vector.broadcast %cst_31 : f32 to vector<2x1x8x4xf32>
    %28 = vector.extract_strided_slice %11 {offsets = [0, 1, 0, 0], sizes = [2, 7, 8, 4], strides = [1, 1, 1, 1]} : vector<2x8x8x4xf32> to vector<2x7x8x4xf32>
    %29 = tpu.concatenate %28, %27 in 1 : vector<2x7x8x4xf32>, vector<2x1x8x4xf32> -> vector<2x8x8x4xf32>
    %30 = vector.shape_cast %29 : vector<2x8x8x4xf32> to vector<128x4xf32>
    %31 = arith.truncf %30 : vector<128x4xf32> to vector<128x4xbf16>
    %c2 = arith.constant 2 : index
    %c0_32 = arith.constant 0 : index
    %c0_33 = arith.constant 0 : index
    %c0_34 = arith.constant 0 : index
    %32 = vector.load %arg3[%c2, %c0_32, %c0_33, %c0_34] : memref<3x3x4x4xbf16, #tpu.memory_space<vmem>>, vector<1x1x4x4xbf16>
    %33 = vector.shape_cast %32 : vector<1x1x4x4xbf16> to vector<4x4xbf16>
    %cst_35 = arith.constant dense<0.000000e+00> : vector<128x4xf32>
    %34 = tpu.matmul %31, %33, %cst_35 {dimension_numbers = #tpu.dot_dimension_numbers<[1], [0], [0], [1], [0, 0, 1, 1], [], []>} : vector<128x4xbf16>, vector<4x4xbf16>, vector<128x4xf32> -> vector<128x4xf32>
    %35 = arith.addf %26, %34 : vector<128x4xf32>
    %c0_36 = arith.constant 0 : index
    %c0_37 = arith.constant 0 : index
    %c1_38 = arith.constant 1 : index
    %c0_39 = arith.constant 0 : index
    %36 = vector.load %arg6[%c0_36, %c0_37, %c1_38, %c0_39] : memref<2x8x10x4xf32, #tpu.memory_space<vmem>>, vector<2x8x8x4xf32>
    %cst_40 = arith.constant 0.000000e+00 : f32
    %37 = vector.broadcast %cst_40 : f32 to vector<2x1x8x4xf32>
    %38 = vector.extract_strided_slice %36 {offsets = [0, 0, 0, 0], sizes = [2, 7, 8, 4], strides = [1, 1, 1, 1]} : vector<2x8x8x4xf32> to vector<2x7x8x4xf32>
    %39 = tpu.concatenate %37, %38 in 1 : vector<2x1x8x4xf32>, vector<2x7x8x4xf32> -> vector<2x8x8x4xf32>
    %40 = vector.shape_cast %39 : vector<2x8x8x4xf32> to vector<128x4xf32>
    %41 = arith.truncf %40 : vector<128x4xf32> to vector<128x4xbf16>
    %c0_41 = arith.constant 0 : index
    %c1_42 = arith.constant 1 : index
    %c0_43 = arith.constant 0 : index
    %c0_44 = arith.constant 0 : index
    %42 = vector.load %arg3[%c0_41, %c1_42, %c0_43, %c0_44] : memref<3x3x4x4xbf16, #tpu.memory_space<vmem>>, vector<1x1x4x4xbf16>
    %43 = vector.shape_cast %42 : vector<1x1x4x4xbf16> to vector<4x4xbf16>
    %cst_45 = arith.constant dense<0.000000e+00> : vector<128x4xf32>
    %44 = tpu.matmul %41, %43, %cst_45 {dimension_numbers = #tpu.dot_dimension_numbers<[1], [0], [0], [1], [0, 0, 1, 1], [], []>} : vector<128x4xbf16>, vector<4x4xbf16>, vector<128x4xf32> -> vector<128x4xf32>
    %45 = arith.addf %35, %44 : vector<128x4xf32>
    %46 = vector.shape_cast %36 : vector<2x8x8x4xf32> to vector<128x4xf32>
    %47 = arith.truncf %46 : vector<128x4xf32> to vector<128x4xbf16>
    %c1_46 = arith.constant 1 : index
    %c1_47 = arith.constant 1 : index
    %c0_48 = arith.constant 0 : index
    %c0_49 = arith.constant 0 : index
    %48 = vector.load %arg3[%c1_46, %c1_47, %c0_48, %c0_49] : memref<3x3x4x4xbf16, #tpu.memory_space<vmem>>, vector<1x1x4x4xbf16>
    %49 = vector.shape_cast %48 : vector<1x1x4x4xbf16> to vector<4x4xbf16>
    %cst_50 = arith.constant dense<0.000000e+00> : vector<128x4xf32>
    %50 = tpu.matmul %47, %49, %cst_50 {dimension_numbers = #tpu.dot_dimension_numbers<[1], [0], [0], [1], [0, 0, 1, 1], [], []>} : vector<128x4xbf16>, vector<4x4xbf16>, vector<128x4xf32> -> vector<128x4xf32>
    %51 = arith.addf %45, %50 : vector<128x4xf32>
    %cst_51 = arith.constant 0.000000e+00 : f32
    %52 = vector.broadcast %cst_51 : f32 to vector<2x1x8x4xf32>
    %53 = vector.extract_strided_slice %36 {offsets = [0, 1, 0, 0], sizes = [2, 7, 8, 4], strides = [1, 1, 1, 1]} : vector<2x8x8x4xf32> to vector<2x7x8x4xf32>
    %54 = tpu.concatenate %53, %52 in 1 : vector<2x7x8x4xf32>, vector<2x1x8x4xf32> -> vector<2x8x8x4xf32>
    %55 = vector.shape_cast %54 : vector<2x8x8x4xf32> to vector<128x4xf32>
    %56 = arith.truncf %55 : vector<128x4xf32> to vector<128x4xbf16>
    %c2_52 = arith.constant 2 : index
    %c1_53 = arith.constant 1 : index
    %c0_54 = arith.constant 0 : index
    %c0_55 = arith.constant 0 : index
    %57 = vector.load %arg3[%c2_52, %c1_53, %c0_54, %c0_55] : memref<3x3x4x4xbf16, #tpu.memory_space<vmem>>, vector<1x1x4x4xbf16>
    %58 = vector.shape_cast %57 : vector<1x1x4x4xbf16> to vector<4x4xbf16>
    %cst_56 = arith.constant dense<0.000000e+00> : vector<128x4xf32>
    %59 = tpu.matmul %56, %58, %cst_56 {dimension_numbers = #tpu.dot_dimension_numbers<[1], [0], [0], [1], [0, 0, 1, 1], [], []>} : vector<128x4xbf16>, vector<4x4xbf16>, vector<128x4xf32> -> vector<128x4xf32>
    %60 = arith.addf %51, %59 : vector<128x4xf32>
    %c0_57 = arith.constant 0 : index
    %c0_58 = arith.constant 0 : index
    %c2_59 = arith.constant 2 : index
    %c0_60 = arith.constant 0 : index
    %61 = vector.load %arg6[%c0_57, %c0_58, %c2_59, %c0_60] : memref<2x8x10x4xf32, #tpu.memory_space<vmem>>, vector<2x8x8x4xf32>
    %cst_61 = arith.constant 0.000000e+00 : f32
    %62 = vector.broadcast %cst_61 : f32 to vector<2x1x8x4xf32>
    %63 = vector.extract_strided_slice %61 {offsets = [0, 0, 0, 0], sizes = [2, 7, 8, 4], strides = [1, 1, 1, 1]} : vector<2x8x8x4xf32> to vector<2x7x8x4xf32>
    %64 = tpu.concatenate %62, %63 in 1 : vector<2x1x8x4xf32>, vector<2x7x8x4xf32> -> vector<2x8x8x4xf32>
    %65 = vector.shape_cast %64 : vector<2x8x8x4xf32> to vector<128x4xf32>
    %66 = arith.truncf %65 : vector<128x4xf32> to vector<128x4xbf16>
    %c0_62 = arith.constant 0 : index
    %c2_63 = arith.constant 2 : index
    %c0_64 = arith.constant 0 : index
    %c0_65 = arith.constant 0 : index
    %67 = vector.load %arg3[%c0_62, %c2_63, %c0_64, %c0_65] : memref<3x3x4x4xbf16, #tpu.memory_space<vmem>>, vector<1x1x4x4xbf16>
    %68 = vector.shape_cast %67 : vector<1x1x4x4xbf16> to vector<4x4xbf16>
    %cst_66 = arith.constant dense<0.000000e+00> : vector<128x4xf32>
    %69 = tpu.matmul %66, %68, %cst_66 {dimension_numbers = #tpu.dot_dimension_numbers<[1], [0], [0], [1], [0, 0, 1, 1], [], []>} : vector<128x4xbf16>, vector<4x4xbf16>, vector<128x4xf32> -> vector<128x4xf32>
    %70 = arith.addf %60, %69 : vector<128x4xf32>
    %71 = vector.shape_cast %61 : vector<2x8x8x4xf32> to vector<128x4xf32>
    %72 = arith.truncf %71 : vector<128x4xf32> to vector<128x4xbf16>
    %c1_67 = arith.constant 1 : index
    %c2_68 = arith.constant 2 : index
    %c0_69 = arith.constant 0 : index
    %c0_70 = arith.constant 0 : index
    %73 = vector.load %arg3[%c1_67, %c2_68, %c0_69, %c0_70] : memref<3x3x4x4xbf16, #tpu.memory_space<vmem>>, vector<1x1x4x4xbf16>
    %74 = vector.shape_cast %73 : vector<1x1x4x4xbf16> to vector<4x4xbf16>
    %cst_71 = arith.constant dense<0.000000e+00> : vector<128x4xf32>
    %75 = tpu.matmul %72, %74, %cst_71 {dimension_numbers = #tpu.dot_dimension_numbers<[1], [0], [0], [1], [0, 0, 1, 1], [], []>} : vector<128x4xbf16>, vector<4x4xbf16>, vector<128x4xf32> -> vector<128x4xf32>
    %76 = arith.addf %70, %75 : vector<128x4xf32>
    %cst_72 = arith.constant 0.000000e+00 : f32
    %77 = vector.broadcast %cst_72 : f32 to vector<2x1x8x4xf32>
    %78 = vector.extract_strided_slice %61 {offsets = [0, 1, 0, 0], sizes = [2, 7, 8, 4], strides = [1, 1, 1, 1]} : vector<2x8x8x4xf32> to vector<2x7x8x4xf32>
    %79 = tpu.concatenate %78, %77 in 1 : vector<2x7x8x4xf32>, vector<2x1x8x4xf32> -> vector<2x8x8x4xf32>
    %80 = vector.shape_cast %79 : vector<2x8x8x4xf32> to vector<128x4xf32>
    %81 = arith.truncf %80 : vector<128x4xf32> to vector<128x4xbf16>
    %c2_73 = arith.constant 2 : index
    %c2_74 = arith.constant 2 : index
    %c0_75 = arith.constant 0 : index
    %c0_76 = arith.constant 0 : index
    %82 = vector.load %arg3[%c2_73, %c2_74, %c0_75, %c0_76] : memref<3x3x4x4xbf16, #tpu.memory_space<vmem>>, vector<1x1x4x4xbf16>
    %83 = vector.shape_cast %82 : vector<1x1x4x4xbf16> to vector<4x4xbf16>
    %cst_77 = arith.constant dense<0.000000e+00> : vector<128x4xf32>
    %84 = tpu.matmul %81, %83, %cst_77 {dimension_numbers = #tpu.dot_dimension_numbers<[1], [0], [0], [1], [0, 0, 1, 1], [], []>} : vector<128x4xbf16>, vector<4x4xbf16>, vector<128x4xf32> -> vector<128x4xf32>
    %85 = arith.addf %76, %84 : vector<128x4xf32>
    %cst_78 = arith.constant 0.000000e+00 : f32
    %86 = vector.broadcast %cst_78 : f32 to vector<128x4xf32>
    %87 = arith.maximumf %85, %86 : vector<128x4xf32>
    %88 = arith.truncf %87 : vector<128x4xf32> to vector<128x4xbf16>
    %c0_79 = arith.constant 0 : index
    %c0_80 = arith.constant 0 : index
    %89 = vector.load %arg4[%c0_79, %c0_80] : memref<4x16xbf16, #tpu.memory_space<vmem>>, vector<4x16xbf16>
    %cst_81 = arith.constant dense<0.000000e+00> : vector<128x16xf32>
    %90 = tpu.matmul %88, %89, %cst_81 {dimension_numbers = #tpu.dot_dimension_numbers<[1], [0], [0], [1], [0, 0, 1, 1], [], []>} : vector<128x4xbf16>, vector<4x16xbf16>, vector<128x16xf32> -> vector<128x16xf32>
    %c0_82 = arith.constant 0 : index
    %c0_83 = arith.constant 0 : index
    %91 = vector.load %arg1[%c0_82, %c0_83] : memref<128x16xbf16, #tpu.memory_space<vmem>>, vector<128x16xbf16>
    %92 = arith.extf %91 : vector<128x16xbf16> to vector<128x16xf32>
    %93 = arith.addf %90, %92 : vector<128x16xf32>
    %cst_84 = arith.constant 0.000000e+00 : f32
    %94 = vector.broadcast %cst_84 : f32 to vector<128x16xf32>
    %95 = arith.maximumf %93, %94 : vector<128x16xf32>
    %c0_85 = arith.constant 0 : index
    %c0_86 = arith.constant 0 : index
    %96 = vector.load %arg5[%c0_85, %c0_86] : memref<128x16xf32, #tpu.memory_space<vmem>>, vector<128x16xf32>
    tpu.vector_store %arg5[%c0_85, %c0_86], %95 {strides = array<i32>} : memref<128x16xf32, #tpu.memory_space<vmem>>, vector<128x16xf32>,
    return
  }
  func.func @transform_0(%arg0: i32) -> (i32, i32) {
    %c0_i32 = arith.constant 0 : i32
    %c0_i32_0 = arith.constant 0 : i32
    return %arg0, %c0_i32 : i32, i32
  }
  func.func @transform_1(%arg0: i32) -> (i32, i32) {
    %c0_i32 = arith.constant 0 : i32
    %c0_i32_0 = arith.constant 0 : i32
    %c0_i32_1 = arith.constant 0 : i32
    return %c0_i32, %c0_i32_0 : i32, i32
  }
  func.func @transform_2(%arg0: i32) -> (i32, i32, i32, i32) {
    %c0_i32 = arith.constant 0 : i32
    %c0_i32_0 = arith.constant 0 : i32
    %c0_i32_1 = arith.constant 0 : i32
    %c0_i32_2 = arith.constant 0 : i32
    %c0_i32_3 = arith.constant 0 : i32
    return %c0_i32, %c0_i32_0, %c0_i32_1, %c0_i32_2 : i32, i32, i32, i32
  }
  func.func @transform_3(%arg0: i32) -> (i32, i32) {
    %c0_i32 = arith.constant 0 : i32
    %c0_i32_0 = arith.constant 0 : i32
    %c0_i32_1 = arith.constant 0 : i32
    return %c0_i32, %c0_i32_0 : i32, i32
  }
  func.func @transform_4(%arg0: i32) -> (i32, i32) {
    %c0_i32 = arith.constant 0 : i32
    %c0_i32_0 = arith.constant 0 : i32
    return %arg0, %c0_i32 : i32, i32
  }
}

</mosaic_0001>

<llo_original>
// kernel: tpu_custom_call.1
$region0: #{tpu_custom_call.1}
  #allocation0 [shape = 'u32[]', space=smem, size = 0x4, offset = 0x4, fixed_abs, tag = 'smem constant byte address 0x4 - core index']
  #allocation1 [shape = 'u32[72,128]{1,0:T(1,128)}', space=vmem, size = 0x9000, scoped, tag = 'internal scratch']
  #allocation2 [shape = 'f32[2,8,10,4]{3,2,1,0:T(8,128)}', space=vmem, size = 0x20000, scoped, tag = 'scratch operand']
  %s0 = inlined_call_operand.vmem [shape: bf16[128,16], index: 0, kind: input, shape index: {}]
  %s1 = inlined_call_operand.vmem [shape: bf16[16,4], index: 1, kind: input, shape index: {}]
  %s2 = inlined_call_operand.vmem [shape: bf16[3,3,4,4], index: 2, kind: input, shape index: {}]
  %s3 = inlined_call_operand.vmem [shape: bf16[4,16], index: 3, kind: input, shape index: {}]
  %s4 = inlined_call_operand.vmem [shape: f32[128,16], index: 4, kind: output, shape index: {}]
  %s5 = sld [smem:[#allocation0]]
  $region26: #{tpu_custom_call.1} parent=0
    _
  %s7 = ssub.s32 1, %s5
  %s8 = scalar_select 0, %s7, %s5
  // Predicated region
  $region2: #{tpu_custom_call.1} parent=0 // pred_check
    _
  $region3: #{tpu_custom_call.1} parent=0 // pred_check_branch
    %10 = sbr.rel (0) target = $region5
  $region4: #{tpu_custom_call.1} parent=0 // pred_region
    _
  $region5: #{tpu_custom_call.1} parent=0 // pred_fallthru
    _
  // Predicated region
  $region6: #{tpu_custom_call.1} parent=0 // pred_check
    _
  $region7: #{tpu_custom_call.1} parent=0 // pred_check_branch
    %12 = sbr.rel (0) target = $region9
  $region8: #{tpu_custom_call.1} parent=0 // pred_region
    _
  $region9: #{tpu_custom_call.1} parent=0 // pred_fallthru
    _
  // Predicated region
  $region10: #{tpu_custom_call.1} parent=0 // pred_check
    _
  $region11: #{tpu_custom_call.1} parent=0 // pred_check_branch
    %14 = sbr.rel (0) target = $region13
  $region12: #{tpu_custom_call.1} parent=0 // pred_region
    _
  $region13: #{tpu_custom_call.1} parent=0 // pred_fallthru
    _
  // Predicated region
  $region14: #{tpu_custom_call.1} parent=0 // pred_check
    _
  $region15: #{tpu_custom_call.1} parent=0 // pred_check_branch
    %16 = sbr.rel (0) target = $region17
  $region16: #{tpu_custom_call.1} parent=0 // pred_region
    _
  $region17: #{tpu_custom_call.1} parent=0 // pred_fallthru
    _
  %v18 = vld [vmem:[%s0] sm:$0xf]
  %v19 = vld [vmem:[%s0 + $0x4] sm:$0xf]
  %v20 = vld [vmem:[%s0 + $0x8] sm:$0xf]
  %v21 = vld [vmem:[%s0 + $0xc] sm:$0xf]
  %v22 = vld [vmem:[%s0 + $0x10] sm:$0xf]
  %v23 = vld [vmem:[%s0 + $0x14] sm:$0xf]
  %v24 = vld [vmem:[%s0 + $0x18] sm:$0xf]
  %v25 = vld [vmem:[%s0 + $0x1c] sm:$0xf]
  %v26 = vld [vmem:[%s0 + $0x20] sm:$0xf]
  %v27 = vld [vmem:[%s0 + $0x24] sm:$0xf]
  %v28 = vld [vmem:[%s0 + $0x28] sm:$0xf]
  %v29 = vld [vmem:[%s0 + $0x2c] sm:$0xf]
  %v30 = vld [vmem:[%s0 + $0x30] sm:$0xf]
  %v31 = vld [vmem:[%s0 + $0x34] sm:$0xf]
  %v32 = vld [vmem:[%s0 + $0x38] sm:$0xf]
  %v33 = vld [vmem:[%s0 + $0x3c] sm:$0xf]
  %v34 = vld [vmem:[%s1] sm:$0xf]
  %v35 = vld [vmem:[%s1 + $0x4] sm:$0xf]
  %v52 = vunpack.c.l.b16 %v18
  %v53 = vunpack.c.l.b16 %v19
  %v54 = vunpack.c.l.b16 %v20
  %v55 = vunpack.c.l.b16 %v21
  %v56 = vunpack.c.l.b16 %v22
  %v57 = vunpack.c.l.b16 %v23
  %v58 = vunpack.c.l.b16 %v24
  %v59 = vunpack.c.l.b16 %v25
  %v60 = vunpack.c.l.b16 %v26
  %v61 = vunpack.c.l.b16 %v27
  %v62 = vunpack.c.l.b16 %v28
  %v63 = vunpack.c.l.b16 %v29
  %v64 = vunpack.c.l.b16 %v30
  %v65 = vunpack.c.l.b16 %v31
  %v66 = vunpack.c.l.b16 %v32
  %v67 = vunpack.c.l.b16 %v33
  %v68 = vpack.c.b16 %v53, %v52
  %v69 = vpack.c.b16 %v55, %v54
  %v70 = vpack.c.b16 %v57, %v56
  %v71 = vpack.c.b16 %v59, %v58
  %v72 = vpack.c.b16 %v61, %v60
  %v73 = vpack.c.b16 %v63, %v62
  %v74 = vpack.c.b16 %v65, %v64
  %v75 = vpack.c.b16 %v67, %v66
  %v78 = vunpack.c.l.b16 %v34
  %v79 = vunpack.c.l.b16 %v35
  %v80 = vpack.c.b16 %v79, %v78
  %vm82 = vcmask 130048
  %v84 = vsel %vm82, %v68, 0
  %v87 = vsel %vm82, %v69, 0
  %v90 = vsel %vm82, %v70, 0
  %v93 = vsel %vm82, %v71, 0
  %v96 = vsel %vm82, %v72, 0
  %v99 = vsel %vm82, %v73, 0
  %v102 = vsel %vm82, %v74, 0
  %v105 = vsel %vm82, %v75, 0
  %107 = vmatpush.bf16.msra.mxu0 0
  %108 = vmatpush.bf16.msra.mxu0 0
  %109 = vmatpush.bf16.msra.mxu0 0
  %110 = vmatpush.bf16.msra.mxu0 0
  %111 = vmatpush.bf16.msra.mxu0 0
  %112 = vmatpush.bf16.msra.mxu0 0
  %113 = vmatpush.bf16.msra.mxu0 0
  %114 = vmatpush.bf16.msra.mxu0 %v80
  %115 = vmatmul.bf16.gmra.mxu0 %v84
  %v116 = vpop.f32.mrf.mxu0
  %v117 = vadd.f32 0.0, %v116
  %v118 = vpop.f32.mrf.mxu0
  %v119 = vadd.f32 0.0, %v118
  %120 = vmatmul.bf16.gmra.mxu0 %v87
  %v121 = vpop.f32.mrf.mxu0
  %v122 = vadd.f32 0.0, %v121
  %v123 = vpop.f32.mrf.mxu0
  %v124 = vadd.f32 0.0, %v123
  %125 = vmatmul.bf16.gmra.mxu0 %v90
  %v126 = vpop.f32.mrf.mxu0
  %v127 = vadd.f32 0.0, %v126
  %v128 = vpop.f32.mrf.mxu0
  %v129 = vadd.f32 0.0, %v128
  %130 = vmatmul.bf16.gmra.mxu0 %v93
  %v131 = vpop.f32.mrf.mxu0
  %v132 = vadd.f32 0.0, %v131
  %v133 = vpop.f32.mrf.mxu0
  %v134 = vadd.f32 0.0, %v133
  %135 = vmatmul.bf16.gmra.mxu0 %v96
  %v136 = vpop.f32.mrf.mxu0
  %v137 = vadd.f32 0.0, %v136
  %v138 = vpop.f32.mrf.mxu0
  %v139 = vadd.f32 0.0, %v138
  %140 = vmatmul.bf16.gmra.mxu0 %v99
  %v141 = vpop.f32.mrf.mxu0
  %v142 = vadd.f32 0.0, %v141
  %v143 = vpop.f32.mrf.mxu0
  %v144 = vadd.f32 0.0, %v143
  %145 = vmatmul.bf16.gmra.mxu0 %v102
  %v146 = vpop.f32.mrf.mxu0
  %v147 = vadd.f32 0.0, %v146
  %v148 = vpop.f32.mrf.mxu0
  %v149 = vadd.f32 0.0, %v148
  %150 = vmatmul.bf16.gmra.mxu0 %v105
  %v151 = vpop.f32.mrf.mxu0
  %v152 = vadd.f32 0.0, %v151
  %v153 = vpop.f32.mrf.mxu0
  %v154 = vadd.f32 0.0, %v153
  %155 = vdwg.mxu0
  %v156 = vmax.f32 %v117, 0.0
  %v157 = vmax.f32 %v119, 0.0
  %v158 = vmax.f32 %v122, 0.0
  %v159 = vmax.f32 %v124, 0.0
  %v160 = vmax.f32 %v127, 0.0
  %v161 = vmax.f32 %v129, 0.0
  %v162 = vmax.f32 %v132, 0.0
  %v163 = vmax.f32 %v134, 0.0
  %v164 = vmax.f32 %v137, 0.0
  %v165 = vmax.f32 %v139, 0.0
  %v166 = vmax.f32 %v142, 0.0
  %v167 = vmax.f32 %v144, 0.0
  %v168 = vmax.f32 %v147, 0.0
  %v169 = vmax.f32 %v149, 0.0
  %v170 = vmax.f32 %v152, 0.0
  %v171 = vmax.f32 %v154, 0.0
  %vm172 = vcmask 24576
  %173 = vst.msk [vmem:[#allocation2] sm:$0x1] %vm172, 0.0
  %174 = vst.msk [vmem:[#allocation2 + $0x10] sm:$0x1] %vm172, 0.0
  %175 = vst.msk [vmem:[#allocation2 + $0x20] sm:$0x1] %vm172, 0.0
  %176 = vst.msk [vmem:[#allocation2 + $0x30] sm:$0x1] %vm172, 0.0
  %177 = vst.msk [vmem:[#allocation2 + $0x40] sm:$0x1] %vm172, 0.0
  %178 = vst.msk [vmem:[#allocation2 + $0x50] sm:$0x1] %vm172, 0.0
  %179 = vst.msk [vmem:[#allocation2 + $0x60] sm:$0x1] %vm172, 0.0
  %180 = vst.msk [vmem:[#allocation2 + $0x70] sm:$0x1] %vm172, 0.0
  %181 = vst.msk [vmem:[#allocation2 + $0x80] sm:$0x1] %vm172, 0.0
  %182 = vst.msk [vmem:[#allocation2 + $0x90] sm:$0x1] %vm172, 0.0
  %183 = vst.msk [vmem:[#allocation2 + $0xa0] sm:$0x1] %vm172, 0.0
  %184 = vst.msk [vmem:[#allocation2 + $0xb0] sm:$0x1] %vm172, 0.0
  %185 = vst.msk [vmem:[#allocation2 + $0xc0] sm:$0x1] %vm172, 0.0
  %186 = vst.msk [vmem:[#allocation2 + $0xd0] sm:$0x1] %vm172, 0.0
  %187 = vst.msk [vmem:[#allocation2 + $0xe0] sm:$0x1] %vm172, 0.0
  %188 = vst.msk [vmem:[#allocation2 + $0xf0] sm:$0x1] %vm172, 0.0
  %189 = vst.msk [vmem:[#allocation2 + $0x9] sm:$0x1] %vm172, 0.0
  %190 = vst.msk [vmem:[#allocation2 + $0x19] sm:$0x1] %vm172, 0.0
  %191 = vst.msk [vmem:[#allocation2 + $0x29] sm:$0x1] %vm172, 0.0
  %192 = vst.msk [vmem:[#allocation2 + $0x39] sm:$0x1] %vm172, 0.0
  %193 = vst.msk [vmem:[#allocation2 + $0x49] sm:$0x1] %vm172, 0.0
  %194 = vst.msk [vmem:[#allocation2 + $0x59] sm:$0x1] %vm172, 0.0
  %195 = vst.msk [vmem:[#allocation2 + $0x69] sm:$0x1] %vm172, 0.0
  %196 = vst.msk [vmem:[#allocation2 + $0x79] sm:$0x1] %vm172, 0.0
  %197 = vst.msk [vmem:[#allocation2 + $0x89] sm:$0x1] %vm172, 0.0
  %198 = vst.msk [vmem:[#allocation2 + $0x99] sm:$0x1] %vm172, 0.0
  %199 = vst.msk [vmem:[#allocation2 + $0xa9] sm:$0x1] %vm172, 0.0
  %200 = vst.msk [vmem:[#allocation2 + $0xb9] sm:$0x1] %vm172, 0.0
  %201 = vst.msk [vmem:[#allocation2 + $0xc9] sm:$0x1] %vm172, 0.0
  %202 = vst.msk [vmem:[#allocation2 + $0xd9] sm:$0x1] %vm172, 0.0
  %203 = vst.msk [vmem:[#allocation2 + $0xe9] sm:$0x1] %vm172, 0.0
  %204 = vst.msk [vmem:[#allocation2 + $0xf9] sm:$0x1] %vm172, 0.0
  %vm205 = vcmask 31744
  %206 = vst.msk [vmem:[#allocation2 + $0x1] sm:$0xff] %vm205, %v156
  %207 = vst.msk [vmem:[#allocation2 + $0x11] sm:$0xff] %vm205, %v157
  %208 = vst.msk [vmem:[#allocation2 + $0x21] sm:$0xff] %vm205, %v158
  %209 = vst.msk [vmem:[#allocation2 + $0x31] sm:$0xff] %vm205, %v159
  %210 = vst.msk [vmem:[#allocation2 + $0x41] sm:$0xff] %vm205, %v160
  %211 = vst.msk [vmem:[#allocation2 + $0x51] sm:$0xff] %vm205, %v161
  %212 = vst.msk [vmem:[#allocation2 + $0x61] sm:$0xff] %vm205, %v162
  %213 = vst.msk [vmem:[#allocation2 + $0x71] sm:$0xff] %vm205, %v163
  %214 = vst.msk [vmem:[#allocation2 + $0x81] sm:$0xff] %vm205, %v164
  %215 = vst.msk [vmem:[#allocation2 + $0x91] sm:$0xff] %vm205, %v165
  %216 = vst.msk [vmem:[#allocation2 + $0xa1] sm:$0xff] %vm205, %v166
  %217 = vst.msk [vmem:[#allocation2 + $0xb1] sm:$0xff] %vm205, %v167
  %218 = vst.msk [vmem:[#allocation2 + $0xc1] sm:$0xff] %vm205, %v168
  %219 = vst.msk [vmem:[#allocation2 + $0xd1] sm:$0xff] %vm205, %v169
  %220 = vst.msk [vmem:[#allocation2 + $0xe1] sm:$0xff] %vm205, %v170
  %221 = vst.msk [vmem:[#allocation2 + $0xf1] sm:$0xff] %vm205, %v171
  %v222 = vld [vmem:[#allocation2] sm:$0xff]
  %v223 = vld [vmem:[#allocation2 + $0x10] sm:$0xff]
  %v224 = vld [vmem:[#allocation2 + $0x20] sm:$0xff]
  %v225 = vld [vmem:[#allocation2 + $0x30] sm:$0xff]
  %v226 = vld [vmem:[#allocation2 + $0x40] sm:$0xff]
  %v227 = vld [vmem:[#allocation2 + $0x50] sm:$0xff]
  %v228 = vld [vmem:[#allocation2 + $0x60] sm:$0xff]
  %v229 = vld [vmem:[#allocation2 + $0x70] sm:$0xff]
  %v230 = vld [vmem:[#allocation2 + $0x80] sm:$0xff]
  %v231 = vld [vmem:[#allocation2 + $0x90] sm:$0xff]
  %v232 = vld [vmem:[#allocation2 + $0xa0] sm:$0xff]
  %v233 = vld [vmem:[#allocation2 + $0xb0] sm:$0xff]
  %v234 = vld [vmem:[#allocation2 + $0xc0] sm:$0xff]
  %v235 = vld [vmem:[#allocation2 + $0xd0] sm:$0xff]
  %v236 = vld [vmem:[#allocation2 + $0xe0] sm:$0xff]
  %v237 = vld [vmem:[#allocation2 + $0xf0] sm:$0xff]
  %v238 = vpack.c.bf16 %v222, 0.0
  %v239 = vpack.c.bf16 %v224, %v223
  %v240 = vpack.c.bf16 %v226, %v225
  %v241 = vpack.c.bf16 %v228, %v227
  %v242 = vpack.c.bf16 %v230, 0.0
  %v243 = vpack.c.bf16 %v232, %v231
  %v244 = vpack.c.bf16 %v234, %v233
  %v245 = vpack.c.bf16 %v236, %v235
  %v246 = vld [vmem:[%s2] sm:$0x3]
  %v247 = vpack.c.bf16 %v223, %v222
  %v248 = vpack.c.bf16 %v225, %v224
  %v249 = vpack.c.bf16 %v227, %v226
  %v250 = vpack.c.bf16 %v229, %v228
  %v251 = vpack.c.bf16 %v231, %v230
  %v252 = vpack.c.bf16 %v233, %v232
  %v253 = vpack.c.bf16 %v235, %v234
  %v254 = vpack.c.bf16 %v237, %v236
  %s255 = scalar_lea.vmem %s2, 6
  %v256 = vld [vmem:[%s255] sm:$0x3]
  %v258 = vsel %vm205, %v247, 0
  %v261 = vsel %vm205, %v248, 0
  %v264 = vsel %vm205, %v249, 0
  %v267 = vsel %vm205, %v250, 0
  %v270 = vsel %vm205, %v251, 0
  %v273 = vsel %vm205, %v252, 0
  %v276 = vsel %vm205, %v253, 0
  %v279 = vsel %vm205, %v254, 0
  %vm281 = vcmask 1041408
  %v283 = vsel %vm281, %v256, 0
  %285 = vmatpush.bf16.msra.mxu0 0
  %286 = vmatpush.bf16.msra.mxu0 0
  %287 = vmatpush.bf16.msra.mxu0 0
  %288 = vmatpush.bf16.msra.mxu0 0
  %289 = vmatpush.bf16.msra.mxu0 0
  %290 = vmatpush.bf16.msra.mxu0 0
  %291 = vmatpush.bf16.msra.mxu0 0
  %292 = vmatpush.bf16.msra.mxu0 %v283
  %293 = vmatmul.bf16.gmra.mxu0 %v258
  %v294 = vpop.f32.mrf.mxu0
  %v295 = vadd.f32 0.0, %v294
  %v296 = vpop.f32.mrf.mxu0
  %v297 = vadd.f32 0.0, %v296
  %298 = vmatmul.bf16.gmra.mxu0 %v261
  %v299 = vpop.f32.mrf.mxu0
  %v300 = vadd.f32 0.0, %v299
  %v301 = vpop.f32.mrf.mxu0
  %v302 = vadd.f32 0.0, %v301
  %303 = vmatmul.bf16.gmra.mxu0 %v264
  %v304 = vpop.f32.mrf.mxu0
  %v305 = vadd.f32 0.0, %v304
  %v306 = vpop.f32.mrf.mxu0
  %v307 = vadd.f32 0.0, %v306
  %308 = vmatmul.bf16.gmra.mxu0 %v267
  %v309 = vpop.f32.mrf.mxu0
  %v310 = vadd.f32 0.0, %v309
  %v311 = vpop.f32.mrf.mxu0
  %v312 = vadd.f32 0.0, %v311
  %313 = vmatmul.bf16.gmra.mxu0 %v270
  %v314 = vpop.f32.mrf.mxu0
  %v315 = vadd.f32 0.0, %v314
  %v316 = vpop.f32.mrf.mxu0
  %v317 = vadd.f32 0.0, %v316
  %318 = vmatmul.bf16.gmra.mxu0 %v273
  %v319 = vpop.f32.mrf.mxu0
  %v320 = vadd.f32 0.0, %v319
  %v321 = vpop.f32.mrf.mxu0
  %v322 = vadd.f32 0.0, %v321
  %323 = vmatmul.bf16.gmra.mxu0 %v276
  %v324 = vpop.f32.mrf.mxu0
  %v325 = vadd.f32 0.0, %v324
  %v326 = vpop.f32.mrf.mxu0
  %v327 = vadd.f32 0.0, %v326
  %328 = vmatmul.bf16.gmra.mxu0 %v279
  %v329 = vpop.f32.mrf.mxu0
  %v330 = vadd.f32 0.0, %v329
  %v331 = vpop.f32.mrf.mxu0
  %v332 = vadd.f32 0.0, %v331
  %333 = vdwg.mxu0
  %v335 = vsel %vm205, %v238, 0
  %v338 = vsel %vm205, %v239, 0
  %v341 = vsel %vm205, %v240, 0
  %v344 = vsel %vm205, %v241, 0
  %v347 = vsel %vm205, %v242, 0
  %v350 = vsel %vm205, %v243, 0
  %v353 = vsel %vm205, %v244, 0
  %v356 = vsel %vm205, %v245, 0
  %v359 = vsel %vm281, %v246, 0
  %361 = vmatpush.bf16.msra.mxu0 0
  %362 = vmatpush.bf16.msra.mxu0 0
  %363 = vmatpush.bf16.msra.mxu0 0
  %364 = vmatpush.bf16.msra.mxu0 0
  %365 = vmatpush.bf16.msra.mxu0 0
  %366 = vmatpush.bf16.msra.mxu0 0
  %367 = vmatpush.bf16.msra.mxu0 0
  %368 = vmatpush.bf16.msra.mxu0 %v359
  %369 = vmatmul.bf16.gmra.mxu0 %v335
  %v370 = vpop.f32.mrf.mxu0
  %v371 = vadd.f32 %v295, %v370
  %v372 = vpop.f32.mrf.mxu0
  %v373 = vadd.f32 %v297, %v372
  %374 = vmatmul.bf16.gmra.mxu0 %v338
  %v375 = vpop.f32.mrf.mxu0
  %v376 = vadd.f32 %v300, %v375
  %v377 = vpop.f32.mrf.mxu0
  %v378 = vadd.f32 %v302, %v377
  %379 = vmatmul.bf16.gmra.mxu0 %v341
  %v380 = vpop.f32.mrf.mxu0
  %v381 = vadd.f32 %v305, %v380
  %v382 = vpop.f32.mrf.mxu0
  %v383 = vadd.f32 %v307, %v382
  %384 = vmatmul.bf16.gmra.mxu0 %v344
  %v385 = vpop.f32.mrf.mxu0
  %v386 = vadd.f32 %v310, %v385
  %v387 = vpop.f32.mrf.mxu0
  %v388 = vadd.f32 %v312, %v387
  %389 = vmatmul.bf16.gmra.mxu0 %v347
  %v390 = vpop.f32.mrf.mxu0
  %v391 = vadd.f32 %v315, %v390
  %v392 = vpop.f32.mrf.mxu0
  %v393 = vadd.f32 %v317, %v392
  %394 = vmatmul.bf16.gmra.mxu0 %v350
  %v395 = vpop.f32.mrf.mxu0
  %v396 = vadd.f32 %v320, %v395
  %v397 = vpop.f32.mrf.mxu0
  %v398 = vadd.f32 %v322, %v397
  %399 = vmatmul.bf16.gmra.mxu0 %v353
  %v400 = vpop.f32.mrf.mxu0
  %v401 = vadd.f32 %v325, %v400
  %v402 = vpop.f32.mrf.mxu0
  %v403 = vadd.f32 %v327, %v402
  %404 = vmatmul.bf16.gmra.mxu0 %v356
  %v405 = vpop.f32.mrf.mxu0
  %v406 = vadd.f32 %v330, %v405
  %v407 = vpop.f32.mrf.mxu0
  %v408 = vadd.f32 %v332, %v407
  %409 = vdwg.mxu0
  %v410 = vpack.c.bf16 0.0, %v229
  %v411 = vpack.c.bf16 0.0, %v237
  %s412 = scalar_lea.vmem %s2, 12
  %v413 = vld [vmem:[%s412] sm:$0x3]
  %v415 = vsel %vm205, %v410, 0
  %v418 = vsel %vm205, %v411, 0
  %v421 = vsel %vm281, %v413, 0
  %423 = vmatpush.bf16.msra.mxu0 0
  %424 = vmatpush.bf16.msra.mxu0 0
  %425 = vmatpush.bf16.msra.mxu0 0
  %426 = vmatpush.bf16.msra.mxu0 0
  %427 = vmatpush.bf16.msra.mxu0 0
  %428 = vmatpush.bf16.msra.mxu0 0
  %429 = vmatpush.bf16.msra.mxu0 0
  %430 = vmatpush.bf16.msra.mxu0 %v421
  %431 = vmatmul.bf16.gmra.mxu0 %v338
  %v432 = vpop.f32.mrf.mxu0
  %v433 = vadd.f32 0.0, %v432
  %v434 = vpop.f32.mrf.mxu0
  %v435 = vadd.f32 0.0, %v434
  %436 = vmatmul.bf16.gmra.mxu0 %v341
  %v437 = vpop.f32.mrf.mxu0
  %v438 = vadd.f32 0.0, %v437
  %v439 = vpop.f32.mrf.mxu0
  %v440 = vadd.f32 0.0, %v439
  %441 = vmatmul.bf16.gmra.mxu0 %v344
  %v442 = vpop.f32.mrf.mxu0
  %v443 = vadd.f32 0.0, %v442
  %v444 = vpop.f32.mrf.mxu0
  %v445 = vadd.f32 0.0, %v444
  %446 = vmatmul.bf16.gmra.mxu0 %v415
  %v447 = vpop.f32.mrf.mxu0
  %v448 = vadd.f32 0.0, %v447
  %v449 = vpop.f32.mrf.mxu0
  %v450 = vadd.f32 0.0, %v449
  %451 = vmatmul.bf16.gmra.mxu0 %v350
  %v452 = vpop.f32.mrf.mxu0
  %v453 = vadd.f32 0.0, %v452
  %v454 = vpop.f32.mrf.mxu0
  %v455 = vadd.f32 0.0, %v454
  %456 = vmatmul.bf16.gmra.mxu0 %v353
  %v457 = vpop.f32.mrf.mxu0
  %v458 = vadd.f32 0.0, %v457
  %v459 = vpop.f32.mrf.mxu0
  %v460 = vadd.f32 0.0, %v459
  %461 = vmatmul.bf16.gmra.mxu0 %v356
  %v462 = vpop.f32.mrf.mxu0
  %v463 = vadd.f32 0.0, %v462
  %v464 = vpop.f32.mrf.mxu0
  %v465 = vadd.f32 0.0, %v464
  %466 = vmatmul.bf16.gmra.mxu0 %v418
  %v467 = vpop.f32.mrf.mxu0
  %v468 = vadd.f32 0.0, %v467
  %v469 = vpop.f32.mrf.mxu0
  %v470 = vadd.f32 0.0, %v469
  %471 = vdwg.mxu0
  %v472 = vadd.f32 %v371, %v433
  %v473 = vadd.f32 %v373, %v435
  %v474 = vadd.f32 %v376, %v438
  %v475 = vadd.f32 %v378, %v440
  %v476 = vadd.f32 %v381, %v443
  %v477 = vadd.f32 %v383, %v445
  %v478 = vadd.f32 %v386, %v448
  %v479 = vadd.f32 %v388, %v450
  %v480 = vadd.f32 %v391, %v453
  %v481 = vadd.f32 %v393, %v455
  %v482 = vadd.f32 %v396, %v458
  %v483 = vadd.f32 %v398, %v460
  %v484 = vadd.f32 %v401, %v463
  %v485 = vadd.f32 %v403, %v465
  %v486 = vadd.f32 %v406, %v468
  %v487 = vadd.f32 %v408, %v470
  %v488 = vld [vmem:[#allocation2 + $0x1] sm:$0xff]
  %v489 = vld [vmem:[#allocation2 + $0x11] sm:$0xff]
  %v490 = vld [vmem:[#allocation2 + $0x21] sm:$0xff]
  %v491 = vld [vmem:[#allocation2 + $0x31] sm:$0xff]
  %v492 = vld [vmem:[#allocation2 + $0x41] sm:$0xff]
  %v493 = vld [vmem:[#allocation2 + $0x51] sm:$0xff]
  %v494 = vld [vmem:[#allocation2 + $0x61] sm:$0xff]
  %v495 = vld [vmem:[#allocation2 + $0x71] sm:$0xff]
  %v496 = vld [vmem:[#allocation2 + $0x81] sm:$0xff]
  %v497 = vld [vmem:[#allocation2 + $0x91] sm:$0xff]
  %v498 = vld [vmem:[#allocation2 + $0xa1] sm:$0xff]
  %v499 = vld [vmem:[#allocation2 + $0xb1] sm:$0xff]
  %v500 = vld [vmem:[#allocation2 + $0xc1] sm:$0xff]
  %v501 = vld [vmem:[#allocation2 + $0xd1] sm:$0xff]
  %v502 = vld [vmem:[#allocation2 + $0xe1] sm:$0xff]
  %v503 = vld [vmem:[#allocation2 + $0xf1] sm:$0xff]
  %v504 = vpack.c.bf16 %v488, 0.0
  %v505 = vpack.c.bf16 %v490, %v489
  %v506 = vpack.c.bf16 %v492, %v491
  %v507 = vpack.c.bf16 %v494, %v493
  %v508 = vpack.c.bf16 %v496, 0.0
  %v509 = vpack.c.bf16 %v498, %v497
  %v510 = vpack.c.bf16 %v500, %v499
  %v511 = vpack.c.bf16 %v502, %v501
  %s512 = scalar_lea.vmem %s2, 2
  %v513 = vld [vmem:[%s512] sm:$0x3]
  %v515 = vsel %vm205, %v504, 0
  %v518 = vsel %vm205, %v505, 0
  %v521 = vsel %vm205, %v506, 0
  %v524 = vsel %vm205, %v507, 0
  %v527 = vsel %vm205, %v508, 0
  %v530 = vsel %vm205, %v509, 0
  %v533 = vsel %vm205, %v510, 0
  %v536 = vsel %vm205, %v511, 0
  %v539 = vsel %vm281, %v513, 0
  %541 = vmatpush.bf16.msra.mxu0 0
  %542 = vmatpush.bf16.msra.mxu0 0
  %543 = vmatpush.bf16.msra.mxu0 0
  %544 = vmatpush.bf16.msra.mxu0 0
  %545 = vmatpush.bf16.msra.mxu0 0
  %546 = vmatpush.bf16.msra.mxu0 0
  %547 = vmatpush.bf16.msra.mxu0 0
  %548 = vmatpush.bf16.msra.mxu0 %v539
  %549 = vmatmul.bf16.gmra.mxu0 %v515
  %v550 = vpop.f32.mrf.mxu0
  %v551 = vadd.f32 0.0, %v550
  %v552 = vpop.f32.mrf.mxu0
  %v553 = vadd.f32 0.0, %v552
  %554 = vmatmul.bf16.gmra.mxu0 %v518
  %v555 = vpop.f32.mrf.mxu0
  %v556 = vadd.f32 0.0, %v555
  %v557 = vpop.f32.mrf.mxu0
  %v558 = vadd.f32 0.0, %v557
  %559 = vmatmul.bf16.gmra.mxu0 %v521
  %v560 = vpop.f32.mrf.mxu0
  %v561 = vadd.f32 0.0, %v560
  %v562 = vpop.f32.mrf.mxu0
  %v563 = vadd.f32 0.0, %v562
  %564 = vmatmul.bf16.gmra.mxu0 %v524
  %v565 = vpop.f32.mrf.mxu0
  %v566 = vadd.f32 0.0, %v565
  %v567 = vpop.f32.mrf.mxu0
  %v568 = vadd.f32 0.0, %v567
  %569 = vmatmul.bf16.gmra.mxu0 %v527
  %v570 = vpop.f32.mrf.mxu0
  %v571 = vadd.f32 0.0, %v570
  %v572 = vpop.f32.mrf.mxu0
  %v573 = vadd.f32 0.0, %v572
  %574 = vmatmul.bf16.gmra.mxu0 %v530
  %v575 = vpop.f32.mrf.mxu0
  %v576 = vadd.f32 0.0, %v575
  %v577 = vpop.f32.mrf.mxu0
  %v578 = vadd.f32 0.0, %v577
  %579 = vmatmul.bf16.gmra.mxu0 %v533
  %v580 = vpop.f32.mrf.mxu0
  %v581 = vadd.f32 0.0, %v580
  %v582 = vpop.f32.mrf.mxu0
  %v583 = vadd.f32 0.0, %v582
  %584 = vmatmul.bf16.gmra.mxu0 %v536
  %v585 = vpop.f32.mrf.mxu0
  %v586 = vadd.f32 0.0, %v585
  %v587 = vpop.f32.mrf.mxu0
  %v588 = vadd.f32 0.0, %v587
  %589 = vdwg.mxu0
  %v590 = vadd.f32 %v472, %v551
  %v591 = vadd.f32 %v473, %v553
  %v592 = vadd.f32 %v474, %v556
  %v593 = vadd.f32 %v475, %v558
  %v594 = vadd.f32 %v476, %v561
  %v595 = vadd.f32 %v477, %v563
  %v596 = vadd.f32 %v478, %v566
  %v597 = vadd.f32 %v479, %v568
  %v598 = vadd.f32 %v480, %v571
  %v599 = vadd.f32 %v481, %v573
  %v600 = vadd.f32 %v482, %v576
  %v601 = vadd.f32 %v483, %v578
  %v602 = vadd.f32 %v484, %v581
  %v603 = vadd.f32 %v485, %v583
  %v604 = vadd.f32 %v486, %v586
  %v605 = vadd.f32 %v487, %v588
  %v606 = vpack.c.bf16 %v489, %v488
  %v607 = vpack.c.bf16 %v491, %v490
  %v608 = vpack.c.bf16 %v493, %v492
  %v609 = vpack.c.bf16 %v495, %v494
  %v610 = vpack.c.bf16 %v497, %v496
  %v611 = vpack.c.bf16 %v499, %v498
  %v612 = vpack.c.bf16 %v501, %v500
  %v613 = vpack.c.bf16 %v503, %v502
  %s614 = scalar_lea.vmem %s2, 8
  %v615 = vld [vmem:[%s614] sm:$0x3]
  %v617 = vsel %vm205, %v606, 0
  %v620 = vsel %vm205, %v607, 0
  %v623 = vsel %vm205, %v608, 0
  %v626 = vsel %vm205, %v609, 0
  %v629 = vsel %vm205, %v610, 0
  %v632 = vsel %vm205, %v611, 0
  %v635 = vsel %vm205, %v612, 0
  %v638 = vsel %vm205, %v613, 0
  %v641 = vsel %vm281, %v615, 0
  %643 = vmatpush.bf16.msra.mxu0 0
  %644 = vmatpush.bf16.msra.mxu0 0
  %645 = vmatpush.bf16.msra.mxu0 0
  %646 = vmatpush.bf16.msra.mxu0 0
  %647 = vmatpush.bf16.msra.mxu0 0
  %648 = vmatpush.bf16.msra.mxu0 0
  %649 = vmatpush.bf16.msra.mxu0 0
  %650 = vmatpush.bf16.msra.mxu0 %v641
  %651 = vmatmul.bf16.gmra.mxu0 %v617
  %v652 = vpop.f32.mrf.mxu0
  %v653 = vadd.f32 0.0, %v652
  %v654 = vpop.f32.mrf.mxu0
  %v655 = vadd.f32 0.0, %v654
  %656 = vmatmul.bf16.gmra.mxu0 %v620
  %v657 = vpop.f32.mrf.mxu0
  %v658 = vadd.f32 0.0, %v657
  %v659 = vpop.f32.mrf.mxu0
  %v660 = vadd.f32 0.0, %v659
  %661 = vmatmul.bf16.gmra.mxu0 %v623
  %v662 = vpop.f32.mrf.mxu0
  %v663 = vadd.f32 0.0, %v662
  %v664 = vpop.f32.mrf.mxu0
  %v665 = vadd.f32 0.0, %v664
  %666 = vmatmul.bf16.gmra.mxu0 %v626
  %v667 = vpop.f32.mrf.mxu0
  %v668 = vadd.f32 0.0, %v667
  %v669 = vpop.f32.mrf.mxu0
  %v670 = vadd.f32 0.0, %v669
  %671 = vmatmul.bf16.gmra.mxu0 %v629
  %v672 = vpop.f32.mrf.mxu0
  %v673 = vadd.f32 0.0, %v672
  %v674 = vpop.f32.mrf.mxu0
  %v675 = vadd.f32 0.0, %v674
  %676 = vmatmul.bf16.gmra.mxu0 %v632
  %v677 = vpop.f32.mrf.mxu0
  %v678 = vadd.f32 0.0, %v677
  %v679 = vpop.f32.mrf.mxu0
  %v680 = vadd.f32 0.0, %v679
  %681 = vmatmul.bf16.gmra.mxu0 %v635
  %v682 = vpop.f32.mrf.mxu0
  %v683 = vadd.f32 0.0, %v682
  %v684 = vpop.f32.mrf.mxu0
  %v685 = vadd.f32 0.0, %v684
  %686 = vmatmul.bf16.gmra.mxu0 %v638
  %v687 = vpop.f32.mrf.mxu0
  %v688 = vadd.f32 0.0, %v687
  %v689 = vpop.f32.mrf.mxu0
  %v690 = vadd.f32 0.0, %v689
  %691 = vdwg.mxu0
  %v692 = vadd.f32 %v590, %v653
  %v693 = vadd.f32 %v591, %v655
  %v694 = vadd.f32 %v592, %v658
  %v695 = vadd.f32 %v593, %v660
  %v696 = vadd.f32 %v594, %v663
  %v697 = vadd.f32 %v595, %v665
  %v698 = vadd.f32 %v596, %v668
  %v699 = vadd.f32 %v597, %v670
  %v700 = vadd.f32 %v598, %v673
  %v701 = vadd.f32 %v599, %v675
  %v702 = vadd.f32 %v600, %v678
  %v703 = vadd.f32 %v601, %v680
  %v704 = vadd.f32 %v602, %v683
  %v705 = vadd.f32 %v603, %v685
  %v706 = vadd.f32 %v604, %v688
  %v707 = vadd.f32 %v605, %v690
  %v708 = vpack.c.bf16 0.0, %v495
  %v709 = vpack.c.bf16 0.0, %v503
  %s710 = scalar_lea.vmem %s2, 14
  %v711 = vld [vmem:[%s710] sm:$0x3]
  %v713 = vsel %vm205, %v708, 0
  %v716 = vsel %vm205, %v709, 0
  %v719 = vsel %vm281, %v711, 0
  %721 = vmatpush.bf16.msra.mxu0 0
  %722 = vmatpush.bf16.msra.mxu0 0
  %723 = vmatpush.bf16.msra.mxu0 0
  %724 = vmatpush.bf16.msra.mxu0 0
  %725 = vmatpush.bf16.msra.mxu0 0
  %726 = vmatpush.bf16.msra.mxu0 0
  %727 = vmatpush.bf16.msra.mxu0 0
  %728 = vmatpush.bf16.msra.mxu0 %v719
  %729 = vmatmul.bf16.gmra.mxu0 %v518
  %v730 = vpop.f32.mrf.mxu0
  %v731 = vadd.f32 0.0, %v730
  %v732 = vpop.f32.mrf.mxu0
  %v733 = vadd.f32 0.0, %v732
  %734 = vmatmul.bf16.gmra.mxu0 %v521
  %v735 = vpop.f32.mrf.mxu0
  %v736 = vadd.f32 0.0, %v735
  %v737 = vpop.f32.mrf.mxu0
  %v738 = vadd.f32 0.0, %v737
  %739 = vmatmul.bf16.gmra.mxu0 %v524
  %v740 = vpop.f32.mrf.mxu0
  %v741 = vadd.f32 0.0, %v740
  %v742 = vpop.f32.mrf.mxu0
  %v743 = vadd.f32 0.0, %v742
  %744 = vmatmul.bf16.gmra.mxu0 %v713
  %v745 = vpop.f32.mrf.mxu0
  %v746 = vadd.f32 0.0, %v745
  %v747 = vpop.f32.mrf.mxu0
  %v748 = vadd.f32 0.0, %v747
  %749 = vmatmul.bf16.gmra.mxu0 %v530
  %v750 = vpop.f32.mrf.mxu0
  %v751 = vadd.f32 0.0, %v750
  %v752 = vpop.f32.mrf.mxu0
  %v753 = vadd.f32 0.0, %v752
  %754 = vmatmul.bf16.gmra.mxu0 %v533
  %v755 = vpop.f32.mrf.mxu0
  %v756 = vadd.f32 0.0, %v755
  %v757 = vpop.f32.mrf.mxu0
  %v758 = vadd.f32 0.0, %v757
  %759 = vmatmul.bf16.gmra.mxu0 %v536
  %v760 = vpop.f32.mrf.mxu0
  %v761 = vadd.f32 0.0, %v760
  %v762 = vpop.f32.mrf.mxu0
  %v763 = vadd.f32 0.0, %v762
  %764 = vmatmul.bf16.gmra.mxu0 %v716
  %v765 = vpop.f32.mrf.mxu0
  %v766 = vadd.f32 0.0, %v765
  %v767 = vpop.f32.mrf.mxu0
  %v768 = vadd.f32 0.0, %v767
  %769 = vdwg.mxu0
  %v770 = vadd.f32 %v692, %v731
  %v771 = vadd.f32 %v693, %v733
  %v772 = vadd.f32 %v694, %v736
  %v773 = vadd.f32 %v695, %v738
  %v774 = vadd.f32 %v696, %v741
  %v775 = vadd.f32 %v697, %v743
  %v776 = vadd.f32 %v698, %v746
  %v777 = vadd.f32 %v699, %v748
  %v778 = vadd.f32 %v700, %v751
  %v779 = vadd.f32 %v701, %v753
  %v780 = vadd.f32 %v702, %v756
  %v781 = vadd.f32 %v703, %v758
  %v782 = vadd.f32 %v704, %v761
  %v783 = vadd.f32 %v705, %v763
  %v784 = vadd.f32 %v706, %v766
  %v785 = vadd.f32 %v707, %v768
  %v786 = vld [vmem:[#allocation2 + $0x2] sm:$0xff]
  %v787 = vld [vmem:[#allocation2 + $0x12] sm:$0xff]
  %v788 = vld [vmem:[#allocation2 + $0x22] sm:$0xff]
  %v789 = vld [vmem:[#allocation2 + $0x32] sm:$0xff]
  %v790 = vld [vmem:[#allocation2 + $0x42] sm:$0xff]
  %v791 = vld [vmem:[#allocation2 + $0x52] sm:$0xff]
  %v792 = vld [vmem:[#allocation2 + $0x62] sm:$0xff]
  %v793 = vld [vmem:[#allocation2 + $0x72] sm:$0xff]
  %v794 = vld [vmem:[#allocation2 + $0x82] sm:$0xff]
  %v795 = vld [vmem:[#allocation2 + $0x92] sm:$0xff]
  %v796 = vld [vmem:[#allocation2 + $0xa2] sm:$0xff]
  %v797 = vld [vmem:[#allocation2 + $0xb2] sm:$0xff]
  %v798 = vld [vmem:[#allocation2 + $0xc2] sm:$0xff]
  %v799 = vld [vmem:[#allocation2 + $0xd2] sm:$0xff]
  %v800 = vld [vmem:[#allocation2 + $0xe2] sm:$0xff]
  %v801 = vld [vmem:[#allocation2 + $0xf2] sm:$0xff]
  %v802 = vpack.c.bf16 %v786, 0.0
  %v803 = vpack.c.bf16 %v788, %v787
  %v804 = vpack.c.bf16 %v790, %v789
  %v805 = vpack.c.bf16 %v792, %v791
  %v806 = vpack.c.bf16 %v794, 0.0
  %v807 = vpack.c.bf16 %v796, %v795
  %v808 = vpack.c.bf16 %v798, %v797
  %v809 = vpack.c.bf16 %v800, %v799
  %s810 = scalar_lea.vmem %s2, 4
  %v811 = vld [vmem:[%s810] sm:$0x3]
  %v813 = vsel %vm205, %v802, 0
  %v816 = vsel %vm205, %v803, 0
  %v819 = vsel %vm205, %v804, 0
  %v822 = vsel %vm205, %v805, 0
  %v825 = vsel %vm205, %v806, 0
  %v828 = vsel %vm205, %v807, 0
  %v831 = vsel %vm205, %v808, 0
  %v834 = vsel %vm205, %v809, 0
  %v837 = vsel %vm281, %v811, 0
  %839 = vmatpush.bf16.msra.mxu0 0
  %840 = vmatpush.bf16.msra.mxu0 0
  %841 = vmatpush.bf16.msra.mxu0 0
  %842 = vmatpush.bf16.msra.mxu0 0
  %843 = vmatpush.bf16.msra.mxu0 0
  %844 = vmatpush.bf16.msra.mxu0 0
  %845 = vmatpush.bf16.msra.mxu0 0
  %846 = vmatpush.bf16.msra.mxu0 %v837
  %847 = vmatmul.bf16.gmra.mxu0 %v813
  %v848 = vpop.f32.mrf.mxu0
  %v849 = vadd.f32 0.0, %v848
  %v850 = vpop.f32.mrf.mxu0
  %v851 = vadd.f32 0.0, %v850
  %852 = vmatmul.bf16.gmra.mxu0 %v816
  %v853 = vpop.f32.mrf.mxu0
  %v854 = vadd.f32 0.0, %v853
  %v855 = vpop.f32.mrf.mxu0
  %v856 = vadd.f32 0.0, %v855
  %857 = vmatmul.bf16.gmra.mxu0 %v819
  %v858 = vpop.f32.mrf.mxu0
  %v859 = vadd.f32 0.0, %v858
  %v860 = vpop.f32.mrf.mxu0
  %v861 = vadd.f32 0.0, %v860
  %862 = vmatmul.bf16.gmra.mxu0 %v822
  %v863 = vpop.f32.mrf.mxu0
  %v864 = vadd.f32 0.0, %v863
  %v865 = vpop.f32.mrf.mxu0
  %v866 = vadd.f32 0.0, %v865
  %867 = vmatmul.bf16.gmra.mxu0 %v825
  %v868 = vpop.f32.mrf.mxu0
  %v869 = vadd.f32 0.0, %v868
  %v870 = vpop.f32.mrf.mxu0
  %v871 = vadd.f32 0.0, %v870
  %872 = vmatmul.bf16.gmra.mxu0 %v828
  %v873 = vpop.f32.mrf.mxu0
  %v874 = vadd.f32 0.0, %v873
  %v875 = vpop.f32.mrf.mxu0
  %v876 = vadd.f32 0.0, %v875
  %877 = vmatmul.bf16.gmra.mxu0 %v831
  %v878 = vpop.f32.mrf.mxu0
  %v879 = vadd.f32 0.0, %v878
  %v880 = vpop.f32.mrf.mxu0
  %v881 = vadd.f32 0.0, %v880
  %882 = vmatmul.bf16.gmra.mxu0 %v834
  %v883 = vpop.f32.mrf.mxu0
  %v884 = vadd.f32 0.0, %v883
  %v885 = vpop.f32.mrf.mxu0
  %v886 = vadd.f32 0.0, %v885
  %887 = vdwg.mxu0
  %v888 = vadd.f32 %v770, %v849
  %v889 = vadd.f32 %v771, %v851
  %v890 = vadd.f32 %v772, %v854
  %v891 = vadd.f32 %v773, %v856
  %v892 = vadd.f32 %v774, %v859
  %v893 = vadd.f32 %v775, %v861
  %v894 = vadd.f32 %v776, %v864
  %v895 = vadd.f32 %v777, %v866
  %v896 = vadd.f32 %v778, %v869
  %v897 = vadd.f32 %v779, %v871
  %v898 = vadd.f32 %v780, %v874
  %v899 = vadd.f32 %v781, %v876
  %v900 = vadd.f32 %v782, %v879
  %v901 = vadd.f32 %v783, %v881
  %v902 = vadd.f32 %v784, %v884
  %v903 = vadd.f32 %v785, %v886
  %v904 = vpack.c.bf16 %v787, %v786
  %v905 = vpack.c.bf16 %v789, %v788
  %v906 = vpack.c.bf16 %v791, %v790
  %v907 = vpack.c.bf16 %v793, %v792
  %v908 = vpack.c.bf16 %v795, %v794
  %v909 = vpack.c.bf16 %v797, %v796
  %v910 = vpack.c.bf16 %v799, %v798
  %v911 = vpack.c.bf16 %v801, %v800
  %s912 = scalar_lea.vmem %s2, 10
  %v913 = vld [vmem:[%s912] sm:$0x3]
  %v915 = vsel %vm205, %v904, 0
  %v918 = vsel %vm205, %v905, 0
  %v921 = vsel %vm205, %v906, 0
  %v924 = vsel %vm205, %v907, 0
  %v927 = vsel %vm205, %v908, 0
  %v930 = vsel %vm205, %v909, 0
  %v933 = vsel %vm205, %v910, 0
  %v936 = vsel %vm205, %v911, 0
  %v939 = vsel %vm281, %v913, 0
  %941 = vmatpush.bf16.msra.mxu0 0
  %942 = vmatpush.bf16.msra.mxu0 0
  %943 = vmatpush.bf16.msra.mxu0 0
  %944 = vmatpush.bf16.msra.mxu0 0
  %945 = vmatpush.bf16.msra.mxu0 0
  %946 = vmatpush.bf16.msra.mxu0 0
  %947 = vmatpush.bf16.msra.mxu0 0
  %948 = vmatpush.bf16.msra.mxu0 %v939
  %949 = vmatmul.bf16.gmra.mxu0 %v915
  %v950 = vpop.f32.mrf.mxu0
  %v951 = vadd.f32 0.0, %v950
  %v952 = vpop.f32.mrf.mxu0
  %v953 = vadd.f32 0.0, %v952
  %954 = vmatmul.bf16.gmra.mxu0 %v918
  %v955 = vpop.f32.mrf.mxu0
  %v956 = vadd.f32 0.0, %v955
  %v957 = vpop.f32.mrf.mxu0
  %v958 = vadd.f32 0.0, %v957
  %959 = vmatmul.bf16.gmra.mxu0 %v921
  %v960 = vpop.f32.mrf.mxu0
  %v961 = vadd.f32 0.0, %v960
  %v962 = vpop.f32.mrf.mxu0
  %v963 = vadd.f32 0.0, %v962
  %964 = vmatmul.bf16.gmra.mxu0 %v924
  %v965 = vpop.f32.mrf.mxu0
  %v966 = vadd.f32 0.0, %v965
  %v967 = vpop.f32.mrf.mxu0
  %v968 = vadd.f32 0.0, %v967
  %969 = vmatmul.bf16.gmra.mxu0 %v927
  %v970 = vpop.f32.mrf.mxu0
  %v971 = vadd.f32 0.0, %v970
  %v972 = vpop.f32.mrf.mxu0
  %v973 = vadd.f32 0.0, %v972
  %974 = vmatmul.bf16.gmra.mxu0 %v930
  %v975 = vpop.f32.mrf.mxu0
  %v976 = vadd.f32 0.0, %v975
  %v977 = vpop.f32.mrf.mxu0
  %v978 = vadd.f32 0.0, %v977
  %979 = vmatmul.bf16.gmra.mxu0 %v933
  %v980 = vpop.f32.mrf.mxu0
  %v981 = vadd.f32 0.0, %v980
  %v982 = vpop.f32.mrf.mxu0
  %v983 = vadd.f32 0.0, %v982
  %984 = vmatmul.bf16.gmra.mxu0 %v936
  %v985 = vpop.f32.mrf.mxu0
  %v986 = vadd.f32 0.0, %v985
  %v987 = vpop.f32.mrf.mxu0
  %v988 = vadd.f32 0.0, %v987
  %989 = vdwg.mxu0
  %v990 = vadd.f32 %v888, %v951
  %v991 = vadd.f32 %v889, %v953
  %v992 = vadd.f32 %v890, %v956
  %v993 = vadd.f32 %v891, %v958
  %v994 = vadd.f32 %v892, %v961
  %v995 = vadd.f32 %v893, %v963
  %v996 = vadd.f32 %v894, %v966
  %v997 = vadd.f32 %v895, %v968
  %v998 = vadd.f32 %v896, %v971
  %v999 = vadd.f32 %v897, %v973
  %v1000 = vadd.f32 %v898, %v976
  %v1001 = vadd.f32 %v899, %v978
  %v1002 = vadd.f32 %v900, %v981
  %v1003 = vadd.f32 %v901, %v983
  %v1004 = vadd.f32 %v902, %v986
  %v1005 = vadd.f32 %v903, %v988
  %v1006 = vpack.c.bf16 0.0, %v793
  %v1007 = vpack.c.bf16 0.0, %v801
  %s1008 = scalar_lea.vmem %s2, 16
  %v1009 = vld [vmem:[%s1008] sm:$0x3]
  %v1011 = vsel %vm205, %v1006, 0
  %v1014 = vsel %vm205, %v1007, 0
  %v1017 = vsel %vm281, %v1009, 0
  %1019 = vmatpush.bf16.msra.mxu0 0
  %1020 = vmatpush.bf16.msra.mxu0 0
  %1021 = vmatpush.bf16.msra.mxu0 0
  %1022 = vmatpush.bf16.msra.mxu0 0
  %1023 = vmatpush.bf16.msra.mxu0 0
  %1024 = vmatpush.bf16.msra.mxu0 0
  %1025 = vmatpush.bf16.msra.mxu0 0
  %1026 = vmatpush.bf16.msra.mxu0 %v1017
  %1027 = vmatmul.bf16.gmra.mxu0 %v816
  %v1028 = vpop.f32.mrf.mxu0
  %v1029 = vadd.f32 0.0, %v1028
  %v1030 = vpop.f32.mrf.mxu0
  %v1031 = vadd.f32 0.0, %v1030
  %1032 = vmatmul.bf16.gmra.mxu0 %v819
  %v1033 = vpop.f32.mrf.mxu0
  %v1034 = vadd.f32 0.0, %v1033
  %v1035 = vpop.f32.mrf.mxu0
  %v1036 = vadd.f32 0.0, %v1035
  %1037 = vmatmul.bf16.gmra.mxu0 %v822
  %v1038 = vpop.f32.mrf.mxu0
  %v1039 = vadd.f32 0.0, %v1038
  %v1040 = vpop.f32.mrf.mxu0
  %v1041 = vadd.f32 0.0, %v1040
  %1042 = vmatmul.bf16.gmra.mxu0 %v1011
  %v1043 = vpop.f32.mrf.mxu0
  %v1044 = vadd.f32 0.0, %v1043
  %v1045 = vpop.f32.mrf.mxu0
  %v1046 = vadd.f32 0.0, %v1045
  %1047 = vmatmul.bf16.gmra.mxu0 %v828
  %v1048 = vpop.f32.mrf.mxu0
  %v1049 = vadd.f32 0.0, %v1048
  %v1050 = vpop.f32.mrf.mxu0
  %v1051 = vadd.f32 0.0, %v1050
  %1052 = vmatmul.bf16.gmra.mxu0 %v831
  %v1053 = vpop.f32.mrf.mxu0
  %v1054 = vadd.f32 0.0, %v1053
  %v1055 = vpop.f32.mrf.mxu0
  %v1056 = vadd.f32 0.0, %v1055
  %1057 = vmatmul.bf16.gmra.mxu0 %v834
  %v1058 = vpop.f32.mrf.mxu0
  %v1059 = vadd.f32 0.0, %v1058
  %v1060 = vpop.f32.mrf.mxu0
  %v1061 = vadd.f32 0.0, %v1060
  %1062 = vmatmul.bf16.gmra.mxu0 %v1014
  %v1063 = vpop.f32.mrf.mxu0
  %v1064 = vadd.f32 0.0, %v1063
  %v1065 = vpop.f32.mrf.mxu0
  %v1066 = vadd.f32 0.0, %v1065
  %1067 = vdwg.mxu0
  %v1068 = vadd.f32 %v990, %v1029
  %v1069 = vadd.f32 %v991, %v1031
  %v1070 = vadd.f32 %v992, %v1034
  %v1071 = vadd.f32 %v993, %v1036
  %v1072 = vadd.f32 %v994, %v1039
  %v1073 = vadd.f32 %v995, %v1041
  %v1074 = vadd.f32 %v996, %v1044
  %v1075 = vadd.f32 %v997, %v1046
  %v1076 = vadd.f32 %v998, %v1049
  %v1077 = vadd.f32 %v999, %v1051
  %v1078 = vadd.f32 %v1000, %v1054
  %v1079 = vadd.f32 %v1001, %v1056
  %v1080 = vadd.f32 %v1002, %v1059
  %v1081 = vadd.f32 %v1003, %v1061
  %v1082 = vadd.f32 %v1004, %v1064
  %v1083 = vadd.f32 %v1005, %v1066
  %v1084 = vmax.f32 %v1068, 0.0
  %v1085 = vmax.f32 %v1069, 0.0
  %v1086 = vmax.f32 %v1070, 0.0
  %v1087 = vmax.f32 %v1071, 0.0
  %v1088 = vmax.f32 %v1072, 0.0
  %v1089 = vmax.f32 %v1073, 0.0
  %v1090 = vmax.f32 %v1074, 0.0
  %v1091 = vmax.f32 %v1075, 0.0
  %v1092 = vmax.f32 %v1076, 0.0
  %v1093 = vmax.f32 %v1077, 0.0
  %v1094 = vmax.f32 %v1078, 0.0
  %v1095 = vmax.f32 %v1079, 0.0
  %v1096 = vmax.f32 %v1080, 0.0
  %v1097 = vmax.f32 %v1081, 0.0
  %v1098 = vmax.f32 %v1082, 0.0
  %v1099 = vmax.f32 %v1083, 0.0
  %v1100 = vpack.c.bf16 %v1085, %v1084
  %v1101 = vpack.c.bf16 %v1087, %v1086
  %v1102 = vpack.c.bf16 %v1089, %v1088
  %v1103 = vpack.c.bf16 %v1091, %v1090
  %v1104 = vpack.c.bf16 %v1093, %v1092
  %v1105 = vpack.c.bf16 %v1095, %v1094
  %v1106 = vpack.c.bf16 %v1097, %v1096
  %v1107 = vpack.c.bf16 %v1099, %v1098
  %v1108 = vld [vmem:[%s3] sm:$0x3]
  %v1109 = vld [vmem:[%s0] sm:$0xf]
  %v1110 = vld [vmem:[%s0 + $0x4] sm:$0xf]
  %v1111 = vld [vmem:[%s0 + $0x8] sm:$0xf]
  %v1112 = vld [vmem:[%s0 + $0xc] sm:$0xf]
  %v1113 = vld [vmem:[%s0 + $0x10] sm:$0xf]
  %v1114 = vld [vmem:[%s0 + $0x14] sm:$0xf]
  %v1115 = vld [vmem:[%s0 + $0x18] sm:$0xf]
  %v1116 = vld [vmem:[%s0 + $0x1c] sm:$0xf]
  %v1117 = vld [vmem:[%s0 + $0x20] sm:$0xf]
  %v1118 = vld [vmem:[%s0 + $0x24] sm:$0xf]
  %v1119 = vld [vmem:[%s0 + $0x28] sm:$0xf]
  %v1120 = vld [vmem:[%s0 + $0x2c] sm:$0xf]
  %v1121 = vld [vmem:[%s0 + $0x30] sm:$0xf]
  %v1122 = vld [vmem:[%s0 + $0x34] sm:$0xf]
  %v1123 = vld [vmem:[%s0 + $0x38] sm:$0xf]
  %v1124 = vld [vmem:[%s0 + $0x3c] sm:$0xf]
  %v1125 = vunpack.c.l.bf16 %v1109
  %v1126 = vunpack.c.l.bf16 %v1110
  %v1127 = vunpack.c.l.bf16 %v1111
  %v1128 = vunpack.c.l.bf16 %v1112
  %v1129 = vunpack.c.l.bf16 %v1113
  %v1130 = vunpack.c.l.bf16 %v1114
  %v1131 = vunpack.c.l.bf16 %v1115
  %v1132 = vunpack.c.l.bf16 %v1116
  %v1133 = vunpack.c.l.bf16 %v1117
  %v1134 = vunpack.c.l.bf16 %v1118
  %v1135 = vunpack.c.l.bf16 %v1119
  %v1136 = vunpack.c.l.bf16 %v1120
  %v1137 = vunpack.c.l.bf16 %v1121
  %v1138 = vunpack.c.l.bf16 %v1122
  %v1139 = vunpack.c.l.bf16 %v1123
  %v1140 = vunpack.c.l.bf16 %v1124
  %v1142 = vsel %vm205, %v1100, 0
  %v1145 = vsel %vm205, %v1101, 0
  %v1148 = vsel %vm205, %v1102, 0
  %v1151 = vsel %vm205, %v1103, 0
  %v1154 = vsel %vm205, %v1104, 0
  %v1157 = vsel %vm205, %v1105, 0
  %v1160 = vsel %vm205, %v1106, 0
  %v1163 = vsel %vm205, %v1107, 0
  %v1166 = vsel %vm281, %v1108, 0
  %1168 = vmatpush.bf16.msra.mxu0 0
  %1169 = vmatpush.bf16.msra.mxu0 0
  %1170 = vmatpush.bf16.msra.mxu0 0
  %1171 = vmatpush.bf16.msra.mxu0 0
  %1172 = vmatpush.bf16.msra.mxu0 0
  %1173 = vmatpush.bf16.msra.mxu0 0
  %1174 = vmatpush.bf16.msra.mxu0 0
  %1175 = vmatpush.bf16.msra.mxu0 %v1166
  %1176 = vmatmul.bf16.gmra.mxu0 %v1142
  %v1177 = vpop.f32.mrf.mxu0
  %v1178 = vadd.f32 %v1125, %v1177
  %v1179 = vpop.f32.mrf.mxu0
  %v1180 = vadd.f32 %v1126, %v1179
  %1181 = vmatmul.bf16.gmra.mxu0 %v1145
  %v1182 = vpop.f32.mrf.mxu0
  %v1183 = vadd.f32 %v1127, %v1182
  %v1184 = vpop.f32.mrf.mxu0
  %v1185 = vadd.f32 %v1128, %v1184
  %1186 = vmatmul.bf16.gmra.mxu0 %v1148
  %v1187 = vpop.f32.mrf.mxu0
  %v1188 = vadd.f32 %v1129, %v1187
  %v1189 = vpop.f32.mrf.mxu0
  %v1190 = vadd.f32 %v1130, %v1189
  %1191 = vmatmul.bf16.gmra.mxu0 %v1151
  %v1192 = vpop.f32.mrf.mxu0
  %v1193 = vadd.f32 %v1131, %v1192
  %v1194 = vpop.f32.mrf.mxu0
  %v1195 = vadd.f32 %v1132, %v1194
  %1196 = vmatmul.bf16.gmra.mxu0 %v1154
  %v1197 = vpop.f32.mrf.mxu0
  %v1198 = vadd.f32 %v1133, %v1197
  %v1199 = vpop.f32.mrf.mxu0
  %v1200 = vadd.f32 %v1134, %v1199
  %1201 = vmatmul.bf16.gmra.mxu0 %v1157
  %v1202 = vpop.f32.mrf.mxu0
  %v1203 = vadd.f32 %v1135, %v1202
  %v1204 = vpop.f32.mrf.mxu0
  %v1205 = vadd.f32 %v1136, %v1204
  %1206 = vmatmul.bf16.gmra.mxu0 %v1160
  %v1207 = vpop.f32.mrf.mxu0
  %v1208 = vadd.f32 %v1137, %v1207
  %v1209 = vpop.f32.mrf.mxu0
  %v1210 = vadd.f32 %v1138, %v1209
  %1211 = vmatmul.bf16.gmra.mxu0 %v1163
  %v1212 = vpop.f32.mrf.mxu0
  %v1213 = vadd.f32 %v1139, %v1212
  %v1214 = vpop.f32.mrf.mxu0
  %v1215 = vadd.f32 %v1140, %v1214
  %1216 = vdwg.mxu0
  %v1217 = vmax.f32 %v1178, 0.0
  %v1218 = vmax.f32 %v1180, 0.0
  %v1219 = vmax.f32 %v1183, 0.0
  %v1220 = vmax.f32 %v1185, 0.0
  %v1221 = vmax.f32 %v1188, 0.0
  %v1222 = vmax.f32 %v1190, 0.0
  %v1223 = vmax.f32 %v1193, 0.0
  %v1224 = vmax.f32 %v1195, 0.0
  %v1225 = vmax.f32 %v1198, 0.0
  %v1226 = vmax.f32 %v1200, 0.0
  %v1227 = vmax.f32 %v1203, 0.0
  %v1228 = vmax.f32 %v1205, 0.0
  %v1229 = vmax.f32 %v1208, 0.0
  %v1230 = vmax.f32 %v1210, 0.0
  %v1231 = vmax.f32 %v1213, 0.0
  %v1232 = vmax.f32 %v1215, 0.0
  %1233 = vst.msk [vmem:[%s4] sm:$0xff] %vm82, %v1217
  %1234 = vst.msk [vmem:[%s4 + $0x8] sm:$0xff] %vm82, %v1218
  %1235 = vst.msk [vmem:[%s4 + $0x10] sm:$0xff] %vm82, %v1219
  %1236 = vst.msk [vmem:[%s4 + $0x18] sm:$0xff] %vm82, %v1220
  %1237 = vst.msk [vmem:[%s4 + $0x20] sm:$0xff] %vm82, %v1221
  %1238 = vst.msk [vmem:[%s4 + $0x28] sm:$0xff] %vm82, %v1222
  %1239 = vst.msk [vmem:[%s4 + $0x30] sm:$0xff] %vm82, %v1223
  %1240 = vst.msk [vmem:[%s4 + $0x38] sm:$0xff] %vm82, %v1224
  %1241 = vst.msk [vmem:[%s4 + $0x40] sm:$0xff] %vm82, %v1225
  %1242 = vst.msk [vmem:[%s4 + $0x48] sm:$0xff] %vm82, %v1226
  %1243 = vst.msk [vmem:[%s4 + $0x50] sm:$0xff] %vm82, %v1227
  %1244 = vst.msk [vmem:[%s4 + $0x58] sm:$0xff] %vm82, %v1228
  %1245 = vst.msk [vmem:[%s4 + $0x60] sm:$0xff] %vm82, %v1229
  %1246 = vst.msk [vmem:[%s4 + $0x68] sm:$0xff] %vm82, %v1230
  %1247 = vst.msk [vmem:[%s4 + $0x70] sm:$0xff] %vm82, %v1231
  %1248 = vst.msk [vmem:[%s4 + $0x78] sm:$0xff] %vm82, %v1232
  // Predicated region
  $region18: #{tpu_custom_call.1} parent=0 // pred_check
    _
  $region19: #{tpu_custom_call.1} parent=0 // pred_check_branch
    %1250 = sbr.rel (0) target = $region21
  $region20: #{tpu_custom_call.1} parent=0 // pred_region
    _
  $region21: #{tpu_custom_call.1} parent=0 // pred_fallthru
    _
  // Predicated region
  $region22: #{tpu_custom_call.1} parent=0 // pred_check
    _
  $region23: #{tpu_custom_call.1} parent=0 // pred_check_branch
    %1252 = sbr.rel (0) target = $region25
  $region24: #{tpu_custom_call.1} parent=0 // pred_region
    _
  $region25: #{tpu_custom_call.1} parent=0 // pred_fallthru
    _

</llo_original>
